<compile_context>
chip_gen: v6e
topology: v6e:2x2x1
jax: 0.10.0
libtpu: 0.0.40
codegen_flags: <defaults>
</compile_context>

<pallas_src>
import functools

import jax
import jax.numpy as jnp
from jax.experimental import pallas as pl
from jax.experimental.pallas import tpu as pltpu


def _xtanh_kernel(x_ref, o_ref, *, alpha):
    x = x_ref[...]
    o_ref[...] = jnp.tanh(x) + alpha * x


def _pick_width(n, lane_width):
    """Widest lane-dense width (multiple of 128) dividing n; else pad to 128."""
    for w in (lane_width, 512, 256, 128):
        if w <= lane_width and n % w == 0:
            return w, 0
    return 128, (-n) % 128


def xtanh(x, alpha=0.1, *, lane_width=1024, target_block_bytes=2 << 20,
          small_n_fallback=65536):
    """Elementwise tanh(x) + alpha*x (PyTorch xTanh) via a Pallas TPU kernel."""
    orig_shape = x.shape
    dtype = x.dtype
    n = x.size

    # Small-input fallback: pallas_call launch + layout plumbing dominates tiny
    # tensors, and XLA fuses tanh/mul/add into one pass on its own.
    if n < small_n_fallback:
        return jnp.tanh(x) + alpha * x

    itemsize = jnp.dtype(dtype).itemsize
    sublane = max(8, 32 // itemsize)      # 8 for f32, 16 for bf16, 32 for int8/fp8

    W, pad = _pick_width(n, lane_width)

    xf = jnp.reshape(x, (-1,))            # free for contiguous arrays
    if pad:
        # Single extra HBM pass, only when n is not a multiple of 128.
        xf = jnp.pad(xf, (0, pad))
    rows = (n + pad) // W
    x2 = jnp.reshape(xf, (rows, W))

    # ~2 MiB blocks, rounded down to the dtype's sublane alignment.
    block_rows = max(sublane,
                     (target_block_bytes // (W * itemsize)) // sublane * sublane)
    if block_rows >= rows:
        block_rows = rows                 # full-array block: always legal
    grid = (pl.cdiv(rows, block_rows),)   # ragged last block is masked by Pallas

    out = pl.pallas_call(
        functools.partial(_xtanh_kernel, alpha=alpha),
        out_shape=jax.ShapeDtypeStruct((rows, W), dtype),
        grid=grid,
        in_specs=[pl.BlockSpec((block_rows, W), lambda i: (i, 0))],
        out_specs=pl.BlockSpec((block_rows, W), lambda i: (i, 0)),
        compiler_params=pltpu.CompilerParams(
            dimension_semantics=("parallel",),
        ),
    )(x2)

    out_flat = jnp.reshape(out, (-1,))
    if pad:
        out_flat = out_flat[:n]
    return jnp.reshape(out_flat, orig_shape)


if __name__ == "__main__":
    key = jax.random.PRNGKey(0)
    alpha = 0.1
    k1, k2, k3, k4, k5 = jax.random.split(key, 5)

    # 1) Spec-sized input (2, 4, 16, 16): force the Pallas path even though tiny.
    x_small = jax.random.normal(k1, (2, 4, 16, 16), dtype=jnp.float32)
    y_small = jax.block_until_ready(xtanh(x_small, alpha, small_n_fallback=0))
    ref_small = jnp.tanh(x_small) + alpha * x_small
    assert y_small.shape == x_small.shape and y_small.dtype == x_small.dtype
    assert jnp.allclose(y_small, ref_small, atol=1e-6, rtol=1e-6)

    # 2) Larger aligned input: multi-block streaming path (grid > 1), no padding.
    x_big = jax.random.normal(k2, (2, 8, 256, 256), dtype=jnp.float32)
    y_big = jax.block_until_ready(xtanh(x_big, alpha))
    ref_big = jnp.tanh(x_big) + alpha * x_big
    assert jnp.allclose(y_big, ref_big, atol=1e-6, rtol=1e-6)

    # 3) Ragged input divisible by 128 only: narrow-width path, still no padding.
    x_rag = jax.random.normal(k3, (4, 16, 129, 130), dtype=jnp.float32)
    y_rag = jax.block_until_ready(xtanh(x_rag, alpha))
    ref_rag = jnp.tanh(x_rag) + alpha * x_rag
    assert jnp.allclose(y_rag, ref_rag, atol=1e-6, rtol=1e-6)

    # 4) Truly unaligned size (odd element count): exercises the single pad pass.
    x_odd = jax.random.normal(k4, (3, 7, 101, 33), dtype=jnp.float32)
    y_odd = jax.block_until_ready(xtanh(x_odd, alpha, small_n_fallback=0))
    ref_odd = jnp.tanh(x_odd) + alpha * x_odd
    assert y_odd.shape == x_odd.shape
    assert jnp.allclose(y_odd, ref_odd, atol=1e-6, rtol=1e-6)

    # 5) bf16: dtype-aware sublane alignment (16-row groups).
    x_bf = jax.random.normal(k5, (2, 8, 128, 128), dtype=jnp.bfloat16)
    y_bf = jax.block_until_ready(xtanh(x_bf, alpha))
    ref_bf = jnp.tanh(x_bf) + alpha * x_bf
    assert y_bf.dtype == jnp.bfloat16
    assert jnp.allclose(y_bf.astype(jnp.float32), ref_bf.astype(jnp.float32),
                        atol=2e-2, rtol=2e-2)

    print("KERNEL_OK")
</pallas_src>

<mosaic_0001>
module attributes {stable_mosaic.version = 11 : i64} {
  func.func @_xtanh_kernel(%arg0: i32, %arg1: memref<2x1024xf32, #tpu.memory_space<vmem>>, %arg2: memref<2x1024xf32, #tpu.memory_space<vmem>>) attributes {dimension_semantics = [#tpu.dimension_semantics<parallel>], iteration_bounds = array<i64: 1>, scalar_prefetch = 0 : i64, scratch_operands = 0 : i64, tpu.core_type = #tpu.core_type<tc>, window_params = [{transform_indices = @transform_0, window_bounds = array<i64: 2, 1024>}, {transform_indices = @transform_1, window_bounds = array<i64: 2, 1024>}]} {
    %c0 = arith.constant 0 : index
    %c0_0 = arith.constant 0 : index
    %0 = vector.load %arg1[%c0, %c0_0] : memref<2x1024xf32, #tpu.memory_space<vmem>>, vector<2x1024xf32>
    %1 = math.tanh %0 : vector<2x1024xf32>
    %cst = arith.constant 1.000000e-01 : f32
    %2 = vector.broadcast %cst : f32 to vector<2x1024xf32>
    %3 = arith.mulf %2, %0 : vector<2x1024xf32>
    %4 = arith.addf %1, %3 : vector<2x1024xf32>
    %c0_1 = arith.constant 0 : index
    %c0_2 = arith.constant 0 : index
    %5 = vector.load %arg2[%c0_1, %c0_2] : memref<2x1024xf32, #tpu.memory_space<vmem>>, vector<2x1024xf32>
    tpu.vector_store %arg2[%c0_1, %c0_2], %4 {strides = array<i32>} : memref<2x1024xf32, #tpu.memory_space<vmem>>, vector<2x1024xf32>,
    return
  }
  func.func @transform_0(%arg0: i32) -> (i32, i32) {
    %c0_i32 = arith.constant 0 : i32
    %c0_i32_0 = arith.constant 0 : i32
    return %arg0, %c0_i32 : i32, i32
  }
  func.func @transform_1(%arg0: i32) -> (i32, i32) {
    %c0_i32 = arith.constant 0 : i32
    %c0_i32_0 = arith.constant 0 : i32
    return %arg0, %c0_i32 : i32, i32
  }
}

</mosaic_0001>

<llo_original>
// kernel: tpu_custom_call.1
$region0: #{tpu_custom_call.1}
  #allocation0 [shape = 'u32[]', space=smem, size = 0x4, offset = 0x4, fixed_abs, tag = 'smem constant byte address 0x4 - core index']
  #allocation1 [shape = 'u32[144,128]{1,0:T(1,128)}', space=vmem, size = 0x12000, scoped, tag = 'internal scratch']
  %s0 = inlined_call_operand.hbm [shape: f32[2,1024], index: 0, kind: input, shape index: {}]
  %s1 = inlined_call_operand.hbm [shape: f32[2,1024], index: 1, kind: output, shape index: {}]
  %s2 = sld [smem:[#allocation0]]
  $region18: #{tpu_custom_call.1} parent=0
    _
  %s4 = ssub.s32 1, %s2
  %s5 = scalar_select 0, %s4, %s2
  $region1: #{tpu_custom_call.1} parent=0
    #allocation2 [shape = 'u8[8192]{0}', space=vmem, size = 0x2000, scoped, tag = 'input window, operand 0, single buffered']
    #allocation3 [shape = 's32[1]{0}', space=sflag, size = 0x4, scoped, tag = 'scoped memory for tpu_custom_call.1']
    #allocation4 [shape = 's32[1]{0}', space=sflag, size = 0x4, scoped, tag = 'scoped memory for tpu_custom_call.1']
    #allocation5 [shape = 'u8[8192]{0}', space=vmem, size = 0x2000, scoped, tag = 'output window, operand 0, single buffered']
    %6 = vsyncpa [#allocation3], 0
    %7 = vsyncpa [#allocation4], 0
    // Predicated region
    $region2: #{tpu_custom_call.1} parent=1 // pred_check
      _
    $region3: #{tpu_custom_call.1} parent=1 // pred_check_branch
      %9 = sbr.rel (0) target = $region5
    $region4: #{tpu_custom_call.1} parent=1 // pred_region
      %s11 = ssub.s32 256, 256
      %12 = vsyncadd [#allocation3], %s11
      %s14 = sshll.u32 [#allocation2], 4
      %s15 = int_to_ptr.vmem [resolvable:$true] %s14
      %17 = dma.hbm_to_vmem [thread:$0]  %s0, 256, %s15, [#allocation3]
    $region5: #{tpu_custom_call.1} parent=1 // pred_fallthru
      _
    // Predicated region
    $region6: #{tpu_custom_call.1} parent=1 // pred_check
      _
    $region7: #{tpu_custom_call.1} parent=1 // pred_check_branch
      %19 = sbr.rel (0) target = $region9
    $region8: #{tpu_custom_call.1} parent=1 // pred_region
      %20 = dma.done [#allocation3], 256
    $region9: #{tpu_custom_call.1} parent=1 // pred_fallthru
      _
    %v21 = vld [vmem:[#allocation2] sm:$0xff]
    %v22 = vld [vmem:[#allocation2 + $0x8] sm:$0xff]
    %v23 = vtanh.pop %v21
    %v24 = vtanh.pop %v22
    %v25 = vmul.f32 %v21, 0.1
    %v26 = vmul.f32 %v22, 0.1
    %v27 = vadd.f32 %v23, %v25
    %v28 = vadd.f32 %v24, %v26
    %29 = vst [vmem:[#allocation5] sm:$0xff] %v27
    %30 = vst [vmem:[#allocation5 + $0x8] sm:$0xff] %v28
    // Predicated region
    $region10: #{tpu_custom_call.1} parent=1 // pred_check
      _
    $region11: #{tpu_custom_call.1} parent=1 // pred_check_branch
      %32 = sbr.rel (0) target = $region13
    $region12: #{tpu_custom_call.1} parent=1 // pred_region
      %s34 = ssub.s32 256, 256
      %35 = vsyncadd [#allocation4], %s34
      %s37 = sshll.u32 [#allocation5], 4
      %s38 = int_to_ptr.vmem [resolvable:$true] %s37
      %40 = dma.vmem_to_hbm [thread:$0]  %s38, 256, %s1, [#allocation4]
    $region13: #{tpu_custom_call.1} parent=1 // pred_fallthru
      _
    // Predicated region
    $region14: #{tpu_custom_call.1} parent=1 // pred_check
      _
    $region15: #{tpu_custom_call.1} parent=1 // pred_check_branch
      %42 = sbr.rel (0) target = $region17
    $region16: #{tpu_custom_call.1} parent=1 // pred_region
      %43 = dma.done [#allocation4], 256
    $region17: #{tpu_custom_call.1} parent=1 // pred_fallthru
      _
    %44 = vsyncpa [#allocation3], 1
    %45 = vsyncpa [#allocation4], 1

</llo_original>
